<compile_context>
chip_gen: v7x
topology: tpu7x:2x2x1
jax: 0.10.0
libtpu: 0.0.40
codegen_flags: <defaults>
</compile_context>

<pallas_src>
import functools
import math

import numpy as np
import jax
import jax.numpy as jnp
from jax import lax
from jax.experimental import pallas as pl
from jax.experimental.pallas import tpu as pltpu


# ---------------------------------------------------------------------------
# Host-side (numpy, cached) construction of the interpolation matrices.
# ---------------------------------------------------------------------------
@functools.lru_cache(maxsize=None)
def _interp_matrix_np(in_size: int, out_size: int) -> np.ndarray:
    """Bilinear interpolation matrix (out_size, in_size), align_corners=True."""
    if out_size == 1:
        src = np.zeros((1,), dtype=np.float64)
    else:
        src = np.arange(out_size, dtype=np.float64) * ((in_size - 1) / (out_size - 1))
    lo = np.clip(np.floor(src).astype(np.int64), 0, in_size - 1)
    hi = np.minimum(lo + 1, in_size - 1)
    frac = (src - lo).astype(np.float32)
    a = np.zeros((out_size, in_size), dtype=np.float32)
    rows = np.arange(out_size)
    a[rows, lo] += 1.0 - frac
    a[rows, hi] += frac
    return a


@functools.lru_cache(maxsize=None)
def _height_matrix_perm_np(h_in: int, h_out: int, k: int) -> np.ndarray:
    """A_h with rows permuted so row (j*q + g) produces output row (g*k + j).

    With this ordering, k contiguous row-slices of the height-pass result,
    concatenated along lanes, give output rows packed in plain row-major order.
    """
    a = _interp_matrix_np(h_in, h_out)          # (h_out, h_in)
    q = h_out // k
    perm = np.arange(h_out).reshape(q, k).T.reshape(-1)
    return np.ascontiguousarray(a[perm])


@functools.lru_cache(maxsize=None)
def _blockdiag_width_matrix_np(w_in: int, w_out: int, k: int) -> np.ndarray:
    """Block-diagonal width matrix (k*w_in, k*w_out): k copies of A_w^T."""
    awt = _interp_matrix_np(w_in, w_out).T      # (w_in, w_out)
    bd = np.zeros((k * w_in, k * w_out), dtype=np.float32)
    for j in range(k):
        bd[j * w_in:(j + 1) * w_in, j * w_out:(j + 1) * w_out] = awt
    return bd


# ---------------------------------------------------------------------------
# Tiling heuristics.
# ---------------------------------------------------------------------------
def _pick_lane_pack(h_out: int, w_out: int, w_in: int, max_lanes: int = 512) -> int:
    """Smallest divisor k of h_out with k*w_out >= 128 (bounded); 1 otherwise."""
    if w_out >= 128:
        return 1
    best = 1
    for k in range(1, h_out + 1):
        if h_out % k:
            continue
        if k * max(w_in, w_out) > max_lanes:
            break
        best = k
        if k * w_out >= 128:
            break
    return best


def _pad2(rows: int, cols: int, itemsize: int) -> int:
    """Padded VMEM bytes of a 2D tile for the given element size."""
    sub = 32 // itemsize                       # f32 -> 8 sublanes, bf16 -> 16
    r = -(-rows // sub) * sub
    c = -(-cols // 128) * 128
    return r * c * itemsize


def _vmem_footprint(cb, h_in, w_in, h_out, w_out, k, cdt_isz, out_isz) -> int:
    """Conservative per-step VMEM footprint (pipeline buffers + all temporaries)."""
    q = h_out // k
    total = 0
    total += 2 * cb * _pad2(h_in, w_in, cdt_isz)          # x blocks (double-buffered)
    total += 2 * cb * _pad2(q, k * w_out, out_isz)        # out blocks (double-buffered)
    total += 2 * _pad2(h_out, h_in, cdt_isz)              # A_h (grid-invariant)
    total += 2 * _pad2(k * w_in, k * w_out, cdt_isz)      # block-diag A_w
    # In-kernel temporaries, conservatively assumed live simultaneously:
    total += cb * _pad2(h_out, h_in, cdt_isz)             # broadcast A_h
    total += cb * _pad2(h_out, w_in, 4)                   # height-pass f32 result
    total += cb * _pad2(q, k * w_in, 4)                   # lane-packed (f32)
    total += cb * _pad2(q, k * w_in, cdt_isz)             # cast copy
    total += cb * _pad2(k * w_in, k * w_out, cdt_isz)     # broadcast A_w
    total += cb * _pad2(q, k * w_out, 4)                  # width-pass f32 result
    total += cb * _pad2(q, k * w_out, out_isz)            # cast before store
    return total


def _choose_channel_block(nc, h_in, w_in, h_out, w_out, k, cdt_isz, out_isz,
                          target_steps=8, vmem_budget=20 * 1024 * 1024) -> int:
    """>= ~target_steps grid steps for pipelining; shrink further if VMEM-bound."""
    cb = max(1, nc // target_steps)
    while cb > 1 and _vmem_footprint(cb, h_in, w_in, h_out, w_out, k,
                                     cdt_isz, out_isz) > vmem_budget:
        cb = max(1, cb // 2)
    return min(cb, nc)


# ---------------------------------------------------------------------------
# Kernel.
# ---------------------------------------------------------------------------
def _upsample_kernel(ahp_ref, awbd_ref, x_ref, o_ref):
    # ahp_ref:  (H_out, H_in)        row-permuted A_h
    # awbd_ref: (k*W_in, k*W_out)    block-diagonal A_w^T
    # x_ref:    (CB, H_in, W_in)
    # o_ref:    (CB, H_out//k, k*W_out)   lane-dense output block
    cb, h_in, w_in = x_ref.shape
    h_out = ahp_ref.shape[0]
    kw_in, kw_out = awbd_ref.shape
    k = kw_in // w_in
    q = h_out // k
    cdt = x_ref.dtype

    x = x_ref[...]

    # Height pass: channel-batched MXU matmul -> (CB, H_out, W_in).  No transposes.
    a_h = jnp.broadcast_to(ahp_ref[...], (cb, h_out, h_in))
    t = lax.dot_general(a_h, x, (((2,), (1,)), ((0,), (0,))),
                        preferred_element_type=jnp.float32)

    # Lane-pack k output rows per sublane row (contiguous slices + lane concat,
    # no reshapes).  Rows were permuted on the host so packing is row-major.
    if k == 1:
        tp = t
    else:
        tp = jnp.concatenate([t[:, j * q:(j + 1) * q, :] for j in range(k)],
                             axis=-1)                       # (CB, q, k*W_in)
    tp = tp.astype(cdt)

    # Width pass: block-diagonal matmul; output lanes are k*W_out >= 128 wide,
    # so the store and the writeback DMA are lane-dense / contiguous in HBM.
    a_w = jnp.broadcast_to(awbd_ref[...], (cb, kw_in, kw_out))
    out = lax.dot_general(tp, a_w, (((2,), (1,)), ((0,), (0,))),
                          preferred_element_type=jnp.float32)  # (CB, q, k*W_out)
    o_ref[...] = out.astype(o_ref.dtype)


# ---------------------------------------------------------------------------
# Wrapper.
# ---------------------------------------------------------------------------
@functools.partial(jax.jit, static_argnames=("scale_factor",))
def upsample_bilinear(x: jnp.ndarray, scale_factor) -> jnp.ndarray:
    """Equivalent of F.interpolate(x, scale_factor=s, mode='bilinear', align_corners=True)."""
    n, c, h_in, w_in = x.shape
    h_out = int(math.floor(h_in * float(scale_factor)))
    w_out = int(math.floor(w_in * float(scale_factor)))
    nc = n * c

    # bf16 stays bf16 through the MXU (f32 accumulation); f32 stays f32 so the
    # result matches PyTorch f32 numerics (review's bf16-cast is a lossy trade).
    compute_dtype = jnp.bfloat16 if x.dtype == jnp.bfloat16 else jnp.float32
    cdt_isz = jnp.dtype(compute_dtype).itemsize
    out_isz = jnp.dtype(x.dtype).itemsize

    k = _pick_lane_pack(h_out, w_out, w_in)
    q = h_out // k

    a_h = jnp.asarray(_height_matrix_perm_np(h_in, h_out, k), dtype=compute_dtype)
    a_w_bd = jnp.asarray(_blockdiag_width_matrix_np(w_in, w_out, k), dtype=compute_dtype)

    cb = _choose_channel_block(nc, h_in, w_in, h_out, w_out, k, cdt_isz, out_isz)
    steps = pl.cdiv(nc, cb)

    footprint = _vmem_footprint(cb, h_in, w_in, h_out, w_out, k, cdt_isz, out_isz)
    vmem_limit = int(min(max(32 * 1024 * 1024, footprint + footprint // 4),
                         56 * 1024 * 1024))

    x_flat = x.reshape(nc, h_in, w_in).astype(compute_dtype)

    out3d = pl.pallas_call(
        _upsample_kernel,
        out_shape=jax.ShapeDtypeStruct((nc, q, k * w_out), x.dtype),
        grid_spec=pltpu.PrefetchScalarGridSpec(
            num_scalar_prefetch=0,
            grid=(steps,),
            in_specs=[
                pl.BlockSpec((h_out, h_in), lambda i: (0, 0)),          # A_h (grid-invariant)
                pl.BlockSpec((k * w_in, k * w_out), lambda i: (0, 0)),  # A_w block-diag
                pl.BlockSpec((cb, h_in, w_in), lambda i: (i, 0, 0)),    # CB channels / step
            ],
            out_specs=pl.BlockSpec((cb, q, k * w_out), lambda i: (i, 0, 0)),
        ),
        compiler_params=pltpu.CompilerParams(
            dimension_semantics=("parallel",),
            vmem_limit_bytes=vmem_limit,
        ),
    )(a_h, a_w_bd, x_flat)

    # (nc, q, k*w_out) is bit-identical to row-major (n, c, h_out, w_out): free reshape.
    return out3d.reshape(n, c, h_out, w_out)


class UpsampleLayer:
    """JAX/Pallas port of the PyTorch UpsampleLayer (bilinear, align_corners=True)."""

    def __init__(self, scale_factor, mode="bilinear"):
        assert mode == "bilinear", "only bilinear mode is implemented"
        self.scale_factor = scale_factor
        self.mode = mode

    def __call__(self, x):
        return upsample_bilinear(x, self.scale_factor)


if __name__ == "__main__":
    key = jax.random.PRNGKey(0)
    x = jax.random.normal(key, (2, 4, 16, 16), dtype=jnp.float32)

    layer = UpsampleLayer(scale_factor=2, mode="bilinear")
    y = layer(x)
    jax.block_until_ready(y)

    assert y.shape == (2, 4, 32, 32), y.shape
    assert y.dtype == x.dtype

    # align_corners=True preserves the corner values exactly.
    assert jnp.allclose(y[:, :, 0, 0], x[:, :, 0, 0], atol=1e-5)
    assert jnp.allclose(y[:, :, -1, -1], x[:, :, -1, -1], atol=1e-5)

    # Full reference (plain XLA einsum over the same interpolation matrices).
    a_h_ref = jnp.asarray(_interp_matrix_np(16, 32))
    a_w_ref = jnp.asarray(_interp_matrix_np(16, 32))
    ref = jnp.einsum("oh,nchw,pw->ncop", a_h_ref, x, a_w_ref)
    assert jnp.allclose(y, ref, atol=1e-4, rtol=1e-4)

    # Second shape: odd channel count, lane-pack width not a multiple of 128.
    x2 = jax.random.normal(jax.random.PRNGKey(0), (1, 3, 20, 20), dtype=jnp.float32)
    y2 = upsample_bilinear(x2, 2)
    jax.block_until_ready(y2)
    a_h2 = jnp.asarray(_interp_matrix_np(20, 40))
    a_w2 = jnp.asarray(_interp_matrix_np(20, 40))
    ref2 = jnp.einsum("oh,nchw,pw->ncop", a_h2, x2, a_w2)
    assert y2.shape == (1, 3, 40, 40)
    assert jnp.allclose(y2, ref2, atol=1e-4, rtol=1e-4)

    # bf16 path: intermediate rounds once more to bf16 (PyTorch uses f32 opmath),
    # so use a loose tolerance.
    xb = x.astype(jnp.bfloat16)
    yb = upsample_bilinear(xb, 2)
    jax.block_until_ready(yb)
    assert yb.dtype == jnp.bfloat16
    assert jnp.allclose(yb.astype(jnp.float32), ref, atol=0.1, rtol=0.05)

    print("KERNEL_OK")
</pallas_src>

<mosaic_0001>
module attributes {stable_mosaic.version = 11 : i64} {
  func.func @_upsample_kernel(%arg0: i32, %arg1: memref<32x16xf32, #tpu.memory_space<vmem>>, %arg2: memref<64x128xf32, #tpu.memory_space<vmem>>, %arg3: memref<1x16x16xf32, #tpu.memory_space<vmem>>, %arg4: memref<1x8x128xf32, #tpu.memory_space<vmem>>) attributes {dimension_semantics = [#tpu.dimension_semantics<parallel>], iteration_bounds = array<i64: 8>, scalar_prefetch = 0 : i64, scratch_operands = 0 : i64, tpu.core_type = #tpu.core_type<tc>, window_params = [{pipeline_mode = #tpu.pipeline_mode<synchronous>, transform_indices = @transform_0, window_bounds = array<i64: 32, 16>}, {pipeline_mode = #tpu.pipeline_mode<synchronous>, transform_indices = @transform_1, window_bounds = array<i64: 64, 128>}, {transform_indices = @transform_2, window_bounds = array<i64: 1, 16, 16>}, {transform_indices = @transform_3, window_bounds = array<i64: 1, 8, 128>}]} {
    %c0 = arith.constant 0 : index
    %c0_0 = arith.constant 0 : index
    %c0_1 = arith.constant 0 : index
    %0 = vector.load %arg3[%c0, %c0_0, %c0_1] : memref<1x16x16xf32, #tpu.memory_space<vmem>>, vector<1x16x16xf32>
    %c0_2 = arith.constant 0 : index
    %c0_3 = arith.constant 0 : index
    %1 = vector.load %arg1[%c0_2, %c0_3] : memref<32x16xf32, #tpu.memory_space<vmem>>, vector<32x16xf32>
    %2 = vector.shape_cast %1 : vector<32x16xf32> to vector<1x32x16xf32>
    %cst = arith.constant dense<0.000000e+00> : vector<1x32x16xf32>
    %3 = tpu.matmul %2, %0, %cst {dimension_numbers = #tpu.dot_dimension_numbers<[2], [1], [1], [2], [0, 0, 0, 1, 1, 2], [0], [0]>} : vector<1x32x16xf32>, vector<1x16x16xf32>, vector<1x32x16xf32> -> vector<1x32x16xf32>
    %4 = vector.extract_strided_slice %3 {offsets = [0, 0, 0], sizes = [1, 8, 16], strides = [1, 1, 1]} : vector<1x32x16xf32> to vector<1x8x16xf32>
    %5 = vector.extract_strided_slice %3 {offsets = [0, 8, 0], sizes = [1, 8, 16], strides = [1, 1, 1]} : vector<1x32x16xf32> to vector<1x8x16xf32>
    %6 = vector.extract_strided_slice %3 {offsets = [0, 16, 0], sizes = [1, 8, 16], strides = [1, 1, 1]} : vector<1x32x16xf32> to vector<1x8x16xf32>
    %7 = vector.extract_strided_slice %3 {offsets = [0, 24, 0], sizes = [1, 8, 16], strides = [1, 1, 1]} : vector<1x32x16xf32> to vector<1x8x16xf32>
    %8 = tpu.concatenate %4, %5, %6, %7 in 2 : vector<1x8x16xf32>, vector<1x8x16xf32>, vector<1x8x16xf32>, vector<1x8x16xf32> -> vector<1x8x64xf32>
    %c0_4 = arith.constant 0 : index
    %c0_5 = arith.constant 0 : index
    %9 = vector.load %arg2[%c0_4, %c0_5] : memref<64x128xf32, #tpu.memory_space<vmem>>, vector<64x128xf32>
    %10 = vector.shape_cast %9 : vector<64x128xf32> to vector<1x64x128xf32>
    %cst_6 = arith.constant dense<0.000000e+00> : vector<1x8x128xf32>
    %11 = tpu.matmul %8, %10, %cst_6 {dimension_numbers = #tpu.dot_dimension_numbers<[2], [1], [1], [2], [0, 0, 0, 1, 1, 2], [0], [0]>} : vector<1x8x64xf32>, vector<1x64x128xf32>, vector<1x8x128xf32> -> vector<1x8x128xf32>
    %c0_7 = arith.constant 0 : index
    %c0_8 = arith.constant 0 : index
    %c0_9 = arith.constant 0 : index
    %12 = vector.load %arg4[%c0_7, %c0_8, %c0_9] : memref<1x8x128xf32, #tpu.memory_space<vmem>>, vector<1x8x128xf32>
    tpu.vector_store %arg4[%c0_7, %c0_8, %c0_9], %11 {strides = array<i32>} : memref<1x8x128xf32, #tpu.memory_space<vmem>>, vector<1x8x128xf32>,
    return
  }
  func.func @transform_0(%arg0: i32) -> (i32, i32) {
    %c0_i32 = arith.constant 0 : i32
    %c0_i32_0 = arith.constant 0 : i32
    %c0_i32_1 = arith.constant 0 : i32
    return %c0_i32, %c0_i32_0 : i32, i32
  }
  func.func @transform_1(%arg0: i32) -> (i32, i32) {
    %c0_i32 = arith.constant 0 : i32
    %c0_i32_0 = arith.constant 0 : i32
    %c0_i32_1 = arith.constant 0 : i32
    return %c0_i32, %c0_i32_0 : i32, i32
  }
  func.func @transform_2(%arg0: i32) -> (i32, i32, i32) {
    %c0_i32 = arith.constant 0 : i32
    %c0_i32_0 = arith.constant 0 : i32
    %c0_i32_1 = arith.constant 0 : i32
    return %arg0, %c0_i32, %c0_i32_0 : i32, i32, i32
  }
  func.func @transform_3(%arg0: i32) -> (i32, i32, i32) {
    %c0_i32 = arith.constant 0 : i32
    %c0_i32_0 = arith.constant 0 : i32
    %c0_i32_1 = arith.constant 0 : i32
    return %arg0, %c0_i32, %c0_i32_0 : i32, i32, i32
  }
}

</mosaic_0001>

<llo_original>
// kernel: upsample_bilinear.1
$region0: #{upsample_bilinear.1}
  #allocation0 [shape = 'u32[]', space=smem, size = 0x4, offset = 0x4, fixed_abs, tag = 'smem constant byte address 0x4 - core index']
  #allocation1 [shape = 'u32[144,128]{1,0:T(1,128)}', space=vmem, size = 0x12000, scoped, tag = 'internal scratch']
  %s0 = inlined_call_operand.hbm [shape: f32[32,16], index: 0, kind: input, shape index: {}]
  %s1 = inlined_call_operand.hbm [shape: f32[64,128], index: 1, kind: input, shape index: {}]
  %s2 = inlined_call_operand.hbm [shape: f32[8,16,16], index: 2, kind: input, shape index: {}]
  %s3 = inlined_call_operand.vmem [shape: f32[8,8,128], index: 3, kind: output, shape index: {}]
  %s4 = sld [smem:[#allocation0]]
  $region57: #{upsample_bilinear.1} parent=0
    _
  %s6 = ssub.s32 1, %s4
  %s7 = scalar_select 0, %s6, %s4
  $region1: #{upsample_bilinear.1} parent=0
    #allocation2 [shape = 'u8[16384]{0}', space=vmem, size = 0x4000, scoped, tag = 'input window, operand 0, single buffered']
    #allocation3 [shape = 's32[2]{0}', space=sflag, size = 0x8, scoped, tag = 'scoped memory for upsample_bilinear.1']
    #allocation4 [shape = 'u8[32768]{0}', space=vmem, size = 0x8000, scoped, tag = 'input window, operand 1, single buffered']
    #allocation5 [shape = 's32[1]{0}', space=sflag, size = 0x4, scoped, tag = 'scoped memory for upsample_bilinear.1']
    #allocation6 [shape = 'u8[16384]{0}', space=vmem, size = 0x4000, scoped, tag = 'input window, operand 2']
    %8 = vsyncpa [#allocation3], 0
    %9 = vsyncpa [#allocation5], 0
    loop: start=0, step=1, limit=10
    $region2: #{upsample_bilinear.1} parent=1 // loop_pre_header
      _
    $region3: #{upsample_bilinear.1} parent=1 // loop_header
      %s11 = sphi 0, %s15
      %p12 = scmp.ge.s32.totalorder %s11, 10
      %s19 = sphi 0, %s19
      %s21 = sphi 0, %s19
      %s22 = sphi 0, %s21
      %s36 = sphi 0, %s22
      %s40 = sphi 0, %s40
      %s42 = sphi 0, %s40
      %s43 = sphi 0, %s42
      %s57 = sphi 0, %s43
      %s63 = sphi 0, %s65
      %s66 = sphi 0, %s63
      %s67 = sphi 0, %s66
      %s83 = sphi 0, %s67
      %s89 = sphi 0, %s91
      %s92 = sphi 0, %s89
      %s93 = sphi 0, %s92
      %s109 = sphi 0, %s93
    $region4: #{upsample_bilinear.1} parent=1 // loop_header_branch
      %14 = sbr.rel (%p12) target = $region8
    $region5: #{upsample_bilinear.1} parent=1 // loop_body
      %s16 = ssub.s32 %s11, 1
      %s17 = ssub.s32 %s11, 2
      %s18 = sadd.s32 %s11, 1
      %s20 = sadd.s32 %s19, 1
      %p23 = scmp.eq.s32.totalorder %s11, 7
      %p24 = scmp.ne.s32.totalorder %s19, %s21
      %p25 = scmp.eq.s32.totalorder %s11, 0
      %p26 = por %p24, %p25
      %p27 = scmp.ne.s32.totalorder %s19, %s21
      %p28 = scmp.eq.s32.totalorder %s16, 7
      %p29 = por %p27, %p28
      %p30 = scmp.ne.s32.totalorder %s21, %s22
      %p31 = scmp.eq.s32.totalorder %s16, 0
      %p32 = por %p30, %p31
      %p33 = scmp.ne.s32.totalorder %s21, %s22
      %p34 = scmp.eq.s32.totalorder %s17, 7
      %p35 = por %p33, %p34
      %p37 = scmp.ne.s32.totalorder %s22, %s36
      %p38 = scmp.eq.s32.totalorder %s17, 0
      %p39 = por %p37, %p38
      %s41 = sadd.s32 %s40, 1
      %p44 = scmp.eq.s32.totalorder %s11, 7
      %p45 = scmp.ne.s32.totalorder %s40, %s42
      %p46 = scmp.eq.s32.totalorder %s11, 0
      %p47 = por %p45, %p46
      %p48 = scmp.ne.s32.totalorder %s40, %s42
      %p49 = scmp.eq.s32.totalorder %s16, 7
      %p50 = por %p48, %p49
      %p51 = scmp.ne.s32.totalorder %s42, %s43
      %p52 = scmp.eq.s32.totalorder %s16, 0
      %p53 = por %p51, %p52
      %p54 = scmp.ne.s32.totalorder %s42, %s43
      %p55 = scmp.eq.s32.totalorder %s17, 7
      %p56 = por %p54, %p55
      %p58 = scmp.ne.s32.totalorder %s43, %s57
      %p59 = scmp.eq.s32.totalorder %s17, 0
      %p60 = por %p58, %p59
      %s61 = ssub.s32 %s11, %s18
      %p62 = scmp.eq.s32.totalorder %s61, 0
      %s64 = sadd.s32 %s63, 1
      %s65 = scalar_select %p62, %s63, %s64
      %p68 = pneg %p62
      %p69 = scmp.eq.s32.totalorder %s11, 7
      %p70 = por %p68, %p69
      %p71 = scmp.ne.s32.totalorder %s63, %s66
      %p72 = scmp.eq.s32.totalorder %s11, 0
      %p73 = por %p71, %p72
      %p74 = scmp.ne.s32.totalorder %s63, %s66
      %p75 = scmp.eq.s32.totalorder %s16, 7
      %p76 = por %p74, %p75
      %p77 = scmp.ne.s32.totalorder %s66, %s67
      %p78 = scmp.eq.s32.totalorder %s16, 0
      %p79 = por %p77, %p78
      %p80 = scmp.ne.s32.totalorder %s66, %s67
      %p81 = scmp.eq.s32.totalorder %s17, 7
      %p82 = por %p80, %p81
      %p84 = scmp.ne.s32.totalorder %s67, %s83
      %p85 = scmp.eq.s32.totalorder %s17, 0
      %p86 = por %p84, %p85
      %s87 = ssub.s32 %s11, %s18
      %p88 = scmp.eq.s32.totalorder %s87, 0
      %s90 = sadd.s32 %s89, 1
      %s91 = scalar_select %p88, %s89, %s90
      %p94 = pneg %p88
      %p95 = scmp.eq.s32.totalorder %s11, 7
      %p96 = por %p94, %p95
      %p97 = scmp.ne.s32.totalorder %s89, %s92
      %p98 = scmp.eq.s32.totalorder %s11, 0
      %p99 = por %p97, %p98
      %p100 = scmp.ne.s32.totalorder %s89, %s92
      %p101 = scmp.eq.s32.totalorder %s16, 7
      %p102 = por %p100, %p101
      %p103 = scmp.ne.s32.totalorder %s92, %s93
      %p104 = scmp.eq.s32.totalorder %s16, 0
      %p105 = por %p103, %p104
      %p106 = scmp.ne.s32.totalorder %s92, %s93
      %p107 = scmp.eq.s32.totalorder %s17, 7
      %p108 = por %p106, %p107
      %p110 = scmp.ne.s32.totalorder %s93, %s109
      %p111 = scmp.eq.s32.totalorder %s17, 0
      %p112 = por %p110, %p111
      %p113 = scmp.le.s32.totalorder 1, %s11
      %p114 = scmp.lt.s32.totalorder %s11, 9
      %p115 = pnand %p113, %p114
      %p116 = pneg %p115
      // Predicated region
      $region9: #{upsample_bilinear.1} parent=5 // pred_check
        _
      $region10: #{upsample_bilinear.1} parent=5 // pred_check_branch
        %118 = sbr.rel (%p115) target = $region12
      $region11: #{upsample_bilinear.1} parent=5 // pred_region
        %s119 = ssub.s32 %s11, 1
        // Predicated region
        $region13: #{upsample_bilinear.1} parent=11 // pred_check
          %p120 = pneg %p32
        $region14: #{upsample_bilinear.1} parent=11 // pred_check_branch
          %122 = sbr.rel (%p120) target = $region16
        $region15: #{upsample_bilinear.1} parent=11 // pred_region
          %s124 = ssub.s32 512, 512
          %125 = vsyncadd [#allocation3], %s124
          %s126 = sshll.u32 [#allocation2], 4
          %s127 = int_to_ptr.vmem [resolvable:$true] %s126
          %132 = dma.hbm_to_vmem [thread:$0]  %s0, 512, %s127, [#allocation3], 128, 128, 8
        $region16: #{upsample_bilinear.1} parent=11 // pred_fallthru
          _
        // Predicated region
        $region17: #{upsample_bilinear.1} parent=11 // pred_check
          %p133 = pneg %p53
        $region18: #{upsample_bilinear.1} parent=11 // pred_check_branch
          %135 = sbr.rel (%p133) target = $region20
        $region19: #{upsample_bilinear.1} parent=11 // pred_region
          %s137 = ssub.s32 1024, 1024
          %138 = vsyncadd [#allocation5], %s137
          %s139 = sshll.u32 [#allocation4], 4
          %s140 = int_to_ptr.vmem [resolvable:$true] %s139
          %145 = dma.hbm_to_vmem [thread:$0]  %s1, 1024, %s140, [#allocation5], 128, 128, 8
        $region20: #{upsample_bilinear.1} parent=11 // pred_fallthru
          _
      $region12: #{upsample_bilinear.1} parent=5 // pred_fallthru
        _
      %p146 = scmp.lt.s32.totalorder %s11, 8
      // Predicated region
      $region21: #{upsample_bilinear.1} parent=5 // pred_check
        %p147 = pneg %p146
      $region22: #{upsample_bilinear.1} parent=5 // pred_check_branch
        %149 = sbr.rel (%p147) target = $region24
      $region23: #{upsample_bilinear.1} parent=5 // pred_region
        // Predicated region
        $region25: #{upsample_bilinear.1} parent=23 // pred_check
          %p150 = pneg %p73
        $region26: #{upsample_bilinear.1} parent=23 // pred_check_branch
          %152 = sbr.rel (%p150) target = $region28
        $region27: #{upsample_bilinear.1} parent=23 // pred_region
          %s153 = sand.u32 %s11, 1
          %s154 = scalar_lea.sflag [#allocation3], %s153
          %s155 = sand.u32 %s63, 1
          %s156 = smul.addr %s155, 16
          %s157 = scalar_lea.vmem [#allocation6], %s156
          %s159 = ssub.s32 256, 256
          %160 = vsyncadd %s154, %s159
          %s161 = smul.addr %s11, 2
          %s162 = smul.addr %s161, 128
          %s163 = scalar_lea.hbm %s2, %s162
          %s164 = sshll.u32 %s157, 4
          %s165 = int_to_ptr.vmem [resolvable:$true] %s164
          %170 = dma.hbm_to_vmem [thread:$0]  %s163, 256, %s165, %s154, 128, 128, 8
        $region28: #{upsample_bilinear.1} parent=23 // pred_fallthru
          _
      $region24: #{upsample_bilinear.1} parent=5 // pred_fallthru
        _
      %p171 = scmp.le.s32.totalorder 1, %s11
      %p172 = scmp.lt.s32.totalorder %s11, 9
      %p173 = pnand %p171, %p172
      %p174 = pneg %p173
      // Predicated region
      $region29: #{upsample_bilinear.1} parent=5 // pred_check
        _
      $region30: #{upsample_bilinear.1} parent=5 // pred_check_branch
        %176 = sbr.rel (%p173) target = $region32
      $region31: #{upsample_bilinear.1} parent=5 // pred_region
        %s177 = ssub.s32 %s11, 1
        // Predicated region
        $region33: #{upsample_bilinear.1} parent=31 // pred_check
          %p178 = pneg %p32
        $region34: #{upsample_bilinear.1} parent=31 // pred_check_branch
          %180 = sbr.rel (%p178) target = $region36
        $region35: #{upsample_bilinear.1} parent=31 // pred_region
          %181 = dma.done [#allocation3], 512
        $region36: #{upsample_bilinear.1} parent=31 // pred_fallthru
          _
        // Predicated region
        $region37: #{upsample_bilinear.1} parent=31 // pred_check
          %p182 = pneg %p53
        $region38: #{upsample_bilinear.1} parent=31 // pred_check_branch
          %184 = sbr.rel (%p182) target = $region40
        $region39: #{upsample_bilinear.1} parent=31 // pred_region
          %185 = dma.done [#allocation5], 1024
        $region40: #{upsample_bilinear.1} parent=31 // pred_fallthru
          _
        %s186 = sand.u32 %s16, 1
        %s187 = scalar_lea.sflag [#allocation3], %s186
        %s188 = sand.u32 %s66, 1
        %s189 = smul.addr %s188, 16
        %s190 = scalar_lea.vmem [#allocation6], %s189
        // Predicated region
        $region41: #{upsample_bilinear.1} parent=31 // pred_check
          %p191 = pneg %p79
        $region42: #{upsample_bilinear.1} parent=31 // pred_check_branch
          %193 = sbr.rel (%p191) target = $region44
        $region43: #{upsample_bilinear.1} parent=31 // pred_region
          %194 = dma.done %s187, 256
        $region44: #{upsample_bilinear.1} parent=31 // pred_fallthru
          _
        %p195 = pneg %p32
        %p196 = pneg %p29
        %p197 = pneg %p53
        %p198 = pneg %p50
        %s199 = sand.u32 %s16, 1
        %s200 = scalar_lea.sflag [#allocation3], %s199
        %s201 = sand.u32 %s66, 1
        %s202 = smul.addr %s201, 16
        %s203 = scalar_lea.vmem [#allocation6], %s202
        %p204 = pneg %p79
        %p205 = pneg %p76
        %p206 = pneg %p105
        %p207 = pneg %p102
        %p208 = scmp.lt.s32.totalorder %s16, 7
        %s209 = scalar_select %p208, %s16, 7
        %s210 = smul.addr %s209, 8
        %s211 = scalar_lea.vmem %s3, %s210
        %p212 = scmp.lt.s32.totalorder %s16, 7
        %s213 = scalar_select %p212, %s16, 7
        %s214 = smul.addr %s213, 8
        %s215 = scalar_lea.vmem %s3, %s214
        %v216 = vld [vmem:[%s190] sm:$0xff]
        %v217 = vld [vmem:[%s190 + $0x8] sm:$0xff]
        %v218 = vld [vmem:[#allocation2] sm:$0xff]
        %v219 = vld [vmem:[#allocation2 + $0x8] sm:$0xff]
        %v220 = vld [vmem:[#allocation2 + $0x10] sm:$0xff]
        %v221 = vld [vmem:[#allocation2 + $0x18] sm:$0xff]
        %vm222 = vcmask 130048
        %v224 = vsel %vm222, %v218, 0
        %v227 = vsel %vm222, %v219, 0
        %v230 = vsel %vm222, %v220, 0
        %v233 = vsel %vm222, %v221, 0
        %235 = vmatprep.subr.mxu0 0.0
        %236 = vmatpush1.msra.mxu0 %v216
        %237 = vmatprep.subr.mxu0 0.0
        %238 = vmatpush1.msra.mxu0 %v217
        %239 = vmatprep.subr.mxu0 0.0
        %240 = vmatpush1.msra.mxu0 0.0
        %241 = vmatprep.subr.mxu0 0.0
        %242 = vmatpush1.msra.mxu0 0.0
        %243 = vmatprep.subr.mxu0 0.0
        %244 = vmatpush1.msra.mxu0 0.0
        %245 = vmatprep.subr.mxu0 0.0
        %246 = vmatpush1.msra.mxu0 0.0
        %247 = vmatprep.subr.mxu0 0.0
        %248 = vmatpush1.msra.mxu0 0.0
        %249 = vmatprep.subr.mxu0 0.0
        %250 = vmatpush1.msra.mxu0 0.0
        %251 = vmatprep.subr.mxu0 0.0
        %252 = vmatpush1.msra.mxu0 0.0
        %253 = vmatprep.subr.mxu0 0.0
        %254 = vmatpush1.msra.mxu0 0.0
        %255 = vmatprep.subr.mxu0 0.0
        %256 = vmatpush1.msra.mxu0 0.0
        %257 = vmatprep.subr.mxu0 0.0
        %258 = vmatpush1.msra.mxu0 0.0
        %259 = vmatprep.subr.mxu0 0.0
        %260 = vmatpush1.msra.mxu0 0.0
        %261 = vmatprep.subr.mxu0 0.0
        %262 = vmatpush1.msra.mxu0 0.0
        %263 = vmatprep.subr.mxu0 0.0
        %264 = vmatpush1.msra.mxu0 0.0
        %265 = vmatprep.subr.mxu0 0.0
        %266 = vmatpush1.msra.mxu0 0.0
        %267 = vmatprep.subr.mxu0 0.0
        %268 = vmatpush1.msra.mxu0 0.0
        %269 = vmatprep.subr.mxu0 0.0
        %270 = vmatpush1.msra.mxu0 0.0
        %271 = vmatprep.subr.mxu0 0.0
        %272 = vmatpush1.msra.mxu0 0.0
        %273 = vmatprep.subr.mxu0 0.0
        %274 = vmatpush1.msra.mxu0 0.0
        %275 = vmatprep.subr.mxu0 0.0
        %276 = vmatpush1.msra.mxu0 0.0
        %277 = vmatprep.subr.mxu0 0.0
        %278 = vmatpush1.msra.mxu0 0.0
        %279 = vmatprep.subr.mxu0 0.0
        %280 = vmatpush1.msra.mxu0 0.0
        %281 = vmatprep.subr.mxu0 0.0
        %282 = vmatpush1.msra.mxu0 0.0
        %283 = vmatprep.subr.mxu0 0.0
        %284 = vmatpush1.msra.mxu0 0.0
        %285 = vmatprep.subr.mxu0 0.0
        %286 = vmatpush1.msra.mxu0 0.0
        %287 = vmatprep.subr.mxu0 0.0
        %288 = vmatpush1.msra.mxu0 0.0
        %289 = vmatprep.subr.mxu0 0.0
        %290 = vmatpush1.msra.mxu0 0.0
        %291 = vmatprep.subr.mxu0 0.0
        %292 = vmatpush1.msra.mxu0 0.0
        %293 = vmatprep.subr.mxu0 0.0
        %294 = vmatpush1.msra.mxu0 0.0
        %295 = vmatprep.subr.mxu0 0.0
        %296 = vmatpush1.msra.mxu0 0.0
        %297 = vmatprep.subr.mxu0 0.0
        %298 = vmatpush1.msra.mxu0 0.0
        %299 = vmatprep.mubr.f32.mxu0 0.0
        %300 = vmatmul.mubr.f32.gmra.mrb[0].mxu0 %v224
        %v301 = vpop.f32.mrb[0].mxu0
        %v302 = vadd.f32 0.0, %v301
        %v303 = vpop.f32.mrb[0].mxu0
        %304 = vmatprep.mubr.f32.mxu0 0.0
        %305 = vmatmul.mubr.f32.gmra.mrb[0].mxu0 %v227
        %v306 = vpop.f32.mrb[0].mxu0
        %v307 = vadd.f32 0.0, %v306
        %v308 = vpop.f32.mrb[0].mxu0
        %309 = vmatprep.mubr.f32.mxu0 0.0
        %310 = vmatmul.mubr.f32.gmra.mrb[0].mxu0 %v230
        %v311 = vpop.f32.mrb[0].mxu0
        %v312 = vadd.f32 0.0, %v311
        %v313 = vpop.f32.mrb[0].mxu0
        %314 = vmatprep.mubr.f32.mxu0 0.0
        %315 = vmatmul.mubr.f32.gmra.mrb[0].mxu0 %v233
        %v316 = vpop.f32.mrb[0].mxu0
        %v317 = vadd.f32 0.0, %v316
        %v318 = vpop.f32.mrb[0].mxu0
        %319 = vdwg.mxu0
        %321 = vrot.lane.b32.xlu0 %v307, 16
        %v322 = vpop.permute.xlu0 %321
        %325 = vrot.lane.b32.xlu0 %v312, 32
        %v326 = vpop.permute.xlu0 %325
        %329 = vrot.lane.b32.xlu0 %v317, 48
        %v330 = vpop.permute.xlu0 %329
        %v332 = vsel %vm222, %v302, %v322
        %vm333 = vcmask 261120
        %v334 = vsel %vm333, %v332, %v326
        %vm335 = vcmask 392192
        %v336 = vsel %vm335, %v334, %v330
        %v337 = vld [vmem:[#allocation4] sm:$0xff]
        %v338 = vld [vmem:[#allocation4 + $0x8] sm:$0xff]
        %v339 = vld [vmem:[#allocation4 + $0x10] sm:$0xff]
        %v340 = vld [vmem:[#allocation4 + $0x18] sm:$0xff]
        %v341 = vld [vmem:[#allocation4 + $0x20] sm:$0xff]
        %v342 = vld [vmem:[#allocation4 + $0x28] sm:$0xff]
        %v343 = vld [vmem:[#allocation4 + $0x30] sm:$0xff]
        %v344 = vld [vmem:[#allocation4 + $0x38] sm:$0xff]
        %vm345 = vcmask 523264
        %v347 = vsel %vm345, %v336, 0
        %349 = vmatprep.subr.mxu0 0.0
        %350 = vmatpush1.msra.mxu0 %v337
        %351 = vmatprep.subr.mxu0 0.0
        %352 = vmatpush1.msra.mxu0 %v338
        %353 = vmatprep.subr.mxu0 0.0
        %354 = vmatpush1.msra.mxu0 %v339
        %355 = vmatprep.subr.mxu0 0.0
        %356 = vmatpush1.msra.mxu0 %v340
        %357 = vmatprep.subr.mxu0 0.0
        %358 = vmatpush1.msra.mxu0 %v341
        %359 = vmatprep.subr.mxu0 0.0
        %360 = vmatpush1.msra.mxu0 %v342
        %361 = vmatprep.subr.mxu0 0.0
        %362 = vmatpush1.msra.mxu0 %v343
        %363 = vmatprep.subr.mxu0 0.0
        %364 = vmatpush1.msra.mxu0 %v344
        %365 = vmatprep.subr.mxu0 0.0
        %366 = vmatpush1.msra.mxu0 0.0
        %367 = vmatprep.subr.mxu0 0.0
        %368 = vmatpush1.msra.mxu0 0.0
        %369 = vmatprep.subr.mxu0 0.0
        %370 = vmatpush1.msra.mxu0 0.0
        %371 = vmatprep.subr.mxu0 0.0
        %372 = vmatpush1.msra.mxu0 0.0
        %373 = vmatprep.subr.mxu0 0.0
        %374 = vmatpush1.msra.mxu0 0.0
        %375 = vmatprep.subr.mxu0 0.0
        %376 = vmatpush1.msra.mxu0 0.0
        %377 = vmatprep.subr.mxu0 0.0
        %378 = vmatpush1.msra.mxu0 0.0
        %379 = vmatprep.subr.mxu0 0.0
        %380 = vmatpush1.msra.mxu0 0.0
        %381 = vmatprep.subr.mxu0 0.0
        %382 = vmatpush1.msra.mxu0 0.0
        %383 = vmatprep.subr.mxu0 0.0
        %384 = vmatpush1.msra.mxu0 0.0
        %385 = vmatprep.subr.mxu0 0.0
        %386 = vmatpush1.msra.mxu0 0.0
        %387 = vmatprep.subr.mxu0 0.0
        %388 = vmatpush1.msra.mxu0 0.0
        %389 = vmatprep.subr.mxu0 0.0
        %390 = vmatpush1.msra.mxu0 0.0
        %391 = vmatprep.subr.mxu0 0.0
        %392 = vmatpush1.msra.mxu0 0.0
        %393 = vmatprep.subr.mxu0 0.0
        %394 = vmatpush1.msra.mxu0 0.0
        %395 = vmatprep.subr.mxu0 0.0
        %396 = vmatpush1.msra.mxu0 0.0
        %397 = vmatprep.subr.mxu0 0.0
        %398 = vmatpush1.msra.mxu0 0.0
        %399 = vmatprep.subr.mxu0 0.0
        %400 = vmatpush1.msra.mxu0 0.0
        %401 = vmatprep.subr.mxu0 0.0
        %402 = vmatpush1.msra.mxu0 0.0
        %403 = vmatprep.subr.mxu0 0.0
        %404 = vmatpush1.msra.mxu0 0.0
        %405 = vmatprep.subr.mxu0 0.0
        %406 = vmatpush1.msra.mxu0 0.0
        %407 = vmatprep.subr.mxu0 0.0
        %408 = vmatpush1.msra.mxu0 0.0
        %409 = vmatprep.subr.mxu0 0.0
        %410 = vmatpush1.msra.mxu0 0.0
        %411 = vmatprep.subr.mxu0 0.0
        %412 = vmatpush1.msra.mxu0 0.0
        %413 = vmatprep.mubr.f32.mxu0 0.0
        %414 = vmatmul.mubr.f32.gmra.mrb[0].mxu0 %v347
        %v415 = vpop.f32.mrb[0].mxu0
        %v416 = vadd.f32 0.0, %v415
        %v417 = vpop.f32.mrb[0].mxu0
        %418 = vdwg.mxu0
        %419 = vst [vmem:[%s215] sm:$0xff] %v416
        %p420 = scmp.lt.s32.totalorder %s16, 7
        %s421 = scalar_select %p420, %s16, 7
        %s422 = smul.addr %s421, 8
        %s423 = scalar_lea.vmem %s3, %s422
        // Predicated region
        $region45: #{upsample_bilinear.1} parent=31 // pred_check
          %p424 = pneg %p102
        $region46: #{upsample_bilinear.1} parent=31 // pred_check_branch
          %426 = sbr.rel (%p424) target = $region48
        $region47: #{upsample_bilinear.1} parent=31 // pred_region
          _
        $region48: #{upsample_bilinear.1} parent=31 // pred_fallthru
          _
      $region32: #{upsample_bilinear.1} parent=5 // pred_fallthru
        _
      %p427 = scmp.le.s32.totalorder 2, %s11
      // Predicated region
      $region49: #{upsample_bilinear.1} parent=5 // pred_check
        %p428 = pneg %p427
      $region50: #{upsample_bilinear.1} parent=5 // pred_check_branch
        %430 = sbr.rel (%p428) target = $region52
      $region51: #{upsample_bilinear.1} parent=5 // pred_region
        %s431 = ssub.s32 %s11, 2
        // Predicated region
        $region53: #{upsample_bilinear.1} parent=51 // pred_check
          %p432 = pneg %p108
        $region54: #{upsample_bilinear.1} parent=51 // pred_check_branch
          %434 = sbr.rel (%p432) target = $region56
        $region55: #{upsample_bilinear.1} parent=51 // pred_region
          %p435 = scmp.lt.s32.totalorder %s17, 7
          %s436 = scalar_select %p435, %s17, 7
          %s437 = smul.addr %s436, 8
          %s438 = scalar_lea.vmem %s3, %s437
        $region56: #{upsample_bilinear.1} parent=51 // pred_fallthru
          _
      $region52: #{upsample_bilinear.1} parent=5 // pred_fallthru
        _
    $region6: #{upsample_bilinear.1} parent=1 // loop_footer
      %s15 = sadd.s32 1, %s11
    $region7: #{upsample_bilinear.1} parent=1 // loop_footer_branch
      %10 = sbr.rel target = $region3
    $region8: #{upsample_bilinear.1} parent=1 // loop_exit
      _
    %439 = vsyncpa [#allocation3], 1
    %s440 = scalar_lea.sflag [#allocation3], 1
    %441 = vsyncpa %s440, 1
    %442 = vsyncpa [#allocation5], 1

</llo_original>
